<compile_context>
chip_gen: v7x
topology: tpu7x:2x2x1
jax: 0.10.0
libtpu: 0.0.40
codegen_flags: <defaults>
</compile_context>

<pallas_src>
import jax
import jax.numpy as jnp
from jax.experimental import pallas as pl
from jax.experimental.pallas import tpu as pltpu


def _sequential_mlp_kernel(x_ref, w1_ref, b1_ref, w2_ref, b2_ref, w3_ref, b3_ref,
                           o_ref):
    """Fused Linear->ReLU->Linear->ReLU->Linear on one batch tile.

    Activations/weights may be f32 or bf16; all matmuls accumulate in f32 and the
    bias-add / ReLU run in f32.  The result is stored in the output dtype.
    """
    w_dtype = w1_ref.dtype

    # Linear(d_in -> d_h1) + ReLU   (MXU matmul, f32 accumulation)
    h = jnp.dot(x_ref[...], w1_ref[...],
                preferred_element_type=jnp.float32) + b1_ref[...]
    h = jnp.maximum(h, 0.0)

    # Linear(d_h1 -> d_h2) + ReLU
    h = jnp.dot(h.astype(w_dtype), w2_ref[...],
                preferred_element_type=jnp.float32) + b2_ref[...]
    h = jnp.maximum(h, 0.0)

    # Linear(d_h2 -> d_out)
    h = jnp.dot(h.astype(w_dtype), w3_ref[...],
                preferred_element_type=jnp.float32) + b3_ref[...]

    o_ref[...] = h.astype(o_ref.dtype)


def sequential_model_forward(x, params, *, tile_m=1024):
    """Run the SequentialModel forward pass with a single fused Pallas kernel.

    x:      [batch, in_features]   (float32 or bfloat16)
    params: dict with w1,b1,w2,b2,w3,b3  (weights already transposed to [in, out])
    """
    w1, b1, w2, b2, w3, b3 = (params["w1"], params["b1"], params["w2"],
                              params["b2"], params["w3"], params["b3"])

    # Weights are tiny (~18 KB) and VMEM-resident: cast them once, outside the
    # kernel, to the activation dtype so the MXU runs natively (bf16 or f32).
    # Biases stay f32 so the bias-add happens on the f32 accumulator.
    w1, w2, w3 = (w.astype(x.dtype) for w in (w1, w2, w3))
    b1, b2, b3 = (b.astype(jnp.float32) for b in (b1, b2, b3))

    batch, d_in = x.shape
    d_h1, d_h2, d_out = w1.shape[1], w2.shape[1], w3.shape[1]

    if batch <= tile_m:
        # Small/medium batch: run the whole thing as one block.  Block shape ==
        # full array dims, so there is no (8,128) divisibility requirement and no
        # pipeline prologue/epilogue overhead.
        tile = batch
        padded_batch = batch
    else:
        # Large batch: big row tiles (multiple of 8 sublanes), pad the batch up to
        # a tile multiple instead of asserting divisibility.
        assert tile_m % 8 == 0, "tile_m must be a multiple of 8 (sublane size)"
        tile = tile_m
        padded_batch = pl.cdiv(batch, tile) * tile
        if padded_batch != batch:
            x = jnp.pad(x, ((0, padded_batch - batch), (0, 0)))

    grid = (padded_batch // tile,)

    # Weights / biases: single full block each, resident in VMEM for every step.
    full = lambda shape: pl.BlockSpec(shape, lambda i: (0,) * len(shape))

    out = pl.pallas_call(
        _sequential_mlp_kernel,
        out_shape=jax.ShapeDtypeStruct((padded_batch, d_out), x.dtype),
        grid=grid,
        in_specs=[
            pl.BlockSpec((tile, d_in), lambda i: (i, 0)),   # x tile (batch rows)
            full((d_in, d_h1)),                             # w1
            full((1, d_h1)),                                # b1
            full((d_h1, d_h2)),                             # w2
            full((1, d_h2)),                                # b2
            full((d_h2, d_out)),                            # w3
            full((1, d_out)),                               # b3
        ],
        out_specs=pl.BlockSpec((tile, d_out), lambda i: (i, 0)),
        compiler_params=pltpu.CompilerParams(
            dimension_semantics=("parallel",)),             # megacore-shardable on v7x
    )(x, w1, b1, w2, b2, w3, b3)

    return out[:batch] if padded_batch != batch else out


def init_params(key, d_in=32, d_h1=64, d_h2=32, d_out=16, dtype=jnp.float32):
    """Deterministic parameter init (PyTorch-style uniform(-1/sqrt(fan_in), +))."""
    ks = jax.random.split(key, 6)

    def lin(kw, kb, fan_in, fan_out):
        bound = 1.0 / jnp.sqrt(fan_in)
        # torch stores W as [out, in]; we store the transpose [in, out].
        w_t = jax.random.uniform(kw, (fan_in, fan_out), dtype, -bound, bound)
        b = jax.random.uniform(kb, (1, fan_out), dtype, -bound, bound)
        return w_t, b

    w1, b1 = lin(ks[0], ks[1], d_in, d_h1)
    w2, b2 = lin(ks[2], ks[3], d_h1, d_h2)
    w3, b3 = lin(ks[4], ks[5], d_h2, d_out)
    return dict(w1=w1, b1=b1, w2=w2, b2=b2, w3=w3, b3=b3)


def reference_forward(x, p):
    """Pure-JAX f32 reference of the same Sequential stack."""
    f32 = jnp.float32
    h = jnp.maximum(x.astype(f32) @ p["w1"].astype(f32) + p["b1"].astype(f32), 0.0)
    h = jnp.maximum(h @ p["w2"].astype(f32) + p["b2"].astype(f32), 0.0)
    return h @ p["w3"].astype(f32) + p["b3"].astype(f32)


if __name__ == "__main__":
    key = jax.random.PRNGKey(0)
    k_x, k_p = jax.random.split(key)

    batch, d_in = 16, 32
    params = init_params(k_p, d_in=d_in, d_h1=64, d_h2=32, d_out=16)
    x = jax.random.normal(k_x, (batch, d_in), jnp.float32)

    # 1) f32, small batch -> single-block (no-grid-overhead) path.
    out = jax.block_until_ready(sequential_model_forward(x, params))
    ref = reference_forward(x, params)
    assert out.shape == (batch, 16)
    assert jnp.allclose(out, ref, atol=1e-5, rtol=1e-5)

    # 2) Ragged batch exercising the tiled + padded path (tiny tile just to force it).
    x2 = jax.random.normal(jax.random.PRNGKey(1), (20, d_in), jnp.float32)
    out2 = jax.block_until_ready(sequential_model_forward(x2, params, tile_m=8))
    assert out2.shape == (20, 16)
    assert jnp.allclose(out2, reference_forward(x2, params), atol=1e-5, rtol=1e-5)

    # 3) bf16 activation-I/O path (weights cast inside wrapper), loose tolerance.
    x_bf = x.astype(jnp.bfloat16)
    out_bf = jax.block_until_ready(sequential_model_forward(x_bf, params))
    params_bf = {k: v.astype(jnp.bfloat16).astype(jnp.float32)
                 for k, v in params.items()}
    ref_bf = reference_forward(x_bf.astype(jnp.float32), params_bf)
    assert out_bf.dtype == jnp.bfloat16
    assert jnp.allclose(out_bf.astype(jnp.float32), ref_bf, atol=5e-2, rtol=5e-2)

    print("KERNEL_OK")
</pallas_src>

<mosaic_0001>
module attributes {stable_mosaic.version = 11 : i64} {
  func.func @_sequential_mlp_kernel(%arg0: i32, %arg1: memref<16x32xf32, #tpu.memory_space<vmem>>, %arg2: memref<32x64xf32, #tpu.memory_space<vmem>>, %arg3: memref<1x64xf32, #tpu.memory_space<vmem>>, %arg4: memref<64x32xf32, #tpu.memory_space<vmem>>, %arg5: memref<1x32xf32, #tpu.memory_space<vmem>>, %arg6: memref<32x16xf32, #tpu.memory_space<vmem>>, %arg7: memref<1x16xf32, #tpu.memory_space<vmem>>, %arg8: memref<16x16xf32, #tpu.memory_space<vmem>>) attributes {dimension_semantics = [#tpu.dimension_semantics<parallel>], iteration_bounds = array<i64: 1>, scalar_prefetch = 0 : i64, scratch_operands = 0 : i64, tpu.core_type = #tpu.core_type<tc>, window_params = [{transform_indices = @transform_0, window_bounds = array<i64: 16, 32>}, {pipeline_mode = #tpu.pipeline_mode<synchronous>, transform_indices = @transform_1, window_bounds = array<i64: 32, 64>}, {pipeline_mode = #tpu.pipeline_mode<synchronous>, transform_indices = @transform_2, window_bounds = array<i64: 1, 64>}, {pipeline_mode = #tpu.pipeline_mode<synchronous>, transform_indices = @transform_3, window_bounds = array<i64: 64, 32>}, {pipeline_mode = #tpu.pipeline_mode<synchronous>, transform_indices = @transform_4, window_bounds = array<i64: 1, 32>}, {pipeline_mode = #tpu.pipeline_mode<synchronous>, transform_indices = @transform_5, window_bounds = array<i64: 32, 16>}, {pipeline_mode = #tpu.pipeline_mode<synchronous>, transform_indices = @transform_6, window_bounds = array<i64: 1, 16>}, {transform_indices = @transform_7, window_bounds = array<i64: 16, 16>}]} {
    %c0 = arith.constant 0 : index
    %c0_0 = arith.constant 0 : index
    %0 = vector.load %arg1[%c0, %c0_0] : memref<16x32xf32, #tpu.memory_space<vmem>>, vector<16x32xf32>
    %c0_1 = arith.constant 0 : index
    %c0_2 = arith.constant 0 : index
    %1 = vector.load %arg2[%c0_1, %c0_2] : memref<32x64xf32, #tpu.memory_space<vmem>>, vector<32x64xf32>
    %cst = arith.constant dense<0.000000e+00> : vector<16x64xf32>
    %2 = tpu.matmul %0, %1, %cst {dimension_numbers = #tpu.dot_dimension_numbers<[1], [0], [0], [1], [0, 0, 1, 1], [], []>} : vector<16x32xf32>, vector<32x64xf32>, vector<16x64xf32> -> vector<16x64xf32>
    %c0_3 = arith.constant 0 : index
    %c0_4 = arith.constant 0 : index
    %3 = vector.load %arg3[%c0_3, %c0_4] : memref<1x64xf32, #tpu.memory_space<vmem>>, vector<1x64xf32>
    %4 = vector.broadcast %3 : vector<1x64xf32> to vector<16x64xf32>
    %5 = arith.addf %2, %4 : vector<16x64xf32>
    %cst_5 = arith.constant 0.000000e+00 : f32
    %6 = vector.broadcast %cst_5 : f32 to vector<16x64xf32>
    %7 = arith.maximumf %5, %6 : vector<16x64xf32>
    %c0_6 = arith.constant 0 : index
    %c0_7 = arith.constant 0 : index
    %8 = vector.load %arg4[%c0_6, %c0_7] : memref<64x32xf32, #tpu.memory_space<vmem>>, vector<64x32xf32>
    %cst_8 = arith.constant dense<0.000000e+00> : vector<16x32xf32>
    %9 = tpu.matmul %7, %8, %cst_8 {dimension_numbers = #tpu.dot_dimension_numbers<[1], [0], [0], [1], [0, 0, 1, 1], [], []>} : vector<16x64xf32>, vector<64x32xf32>, vector<16x32xf32> -> vector<16x32xf32>
    %c0_9 = arith.constant 0 : index
    %c0_10 = arith.constant 0 : index
    %10 = vector.load %arg5[%c0_9, %c0_10] : memref<1x32xf32, #tpu.memory_space<vmem>>, vector<1x32xf32>
    %11 = vector.broadcast %10 : vector<1x32xf32> to vector<16x32xf32>
    %12 = arith.addf %9, %11 : vector<16x32xf32>
    %cst_11 = arith.constant 0.000000e+00 : f32
    %13 = vector.broadcast %cst_11 : f32 to vector<16x32xf32>
    %14 = arith.maximumf %12, %13 : vector<16x32xf32>
    %c0_12 = arith.constant 0 : index
    %c0_13 = arith.constant 0 : index
    %15 = vector.load %arg6[%c0_12, %c0_13] : memref<32x16xf32, #tpu.memory_space<vmem>>, vector<32x16xf32>
    %cst_14 = arith.constant dense<0.000000e+00> : vector<16x16xf32>
    %16 = tpu.matmul %14, %15, %cst_14 {dimension_numbers = #tpu.dot_dimension_numbers<[1], [0], [0], [1], [0, 0, 1, 1], [], []>} : vector<16x32xf32>, vector<32x16xf32>, vector<16x16xf32> -> vector<16x16xf32>
    %c0_15 = arith.constant 0 : index
    %c0_16 = arith.constant 0 : index
    %17 = vector.load %arg7[%c0_15, %c0_16] : memref<1x16xf32, #tpu.memory_space<vmem>>, vector<1x16xf32>
    %18 = vector.broadcast %17 : vector<1x16xf32> to vector<16x16xf32>
    %19 = arith.addf %16, %18 : vector<16x16xf32>
    %c0_17 = arith.constant 0 : index
    %c0_18 = arith.constant 0 : index
    %20 = vector.load %arg8[%c0_17, %c0_18] : memref<16x16xf32, #tpu.memory_space<vmem>>, vector<16x16xf32>
    tpu.vector_store %arg8[%c0_17, %c0_18], %19 {strides = array<i32>} : memref<16x16xf32, #tpu.memory_space<vmem>>, vector<16x16xf32>,
    return
  }
  func.func @transform_0(%arg0: i32) -> (i32, i32) {
    %c0_i32 = arith.constant 0 : i32
    %c0_i32_0 = arith.constant 0 : i32
    return %arg0, %c0_i32 : i32, i32
  }
  func.func @transform_1(%arg0: i32) -> (i32, i32) {
    %c0_i32 = arith.constant 0 : i32
    %c0_i32_0 = arith.constant 0 : i32
    %c0_i32_1 = arith.constant 0 : i32
    return %c0_i32, %c0_i32_0 : i32, i32
  }
  func.func @transform_2(%arg0: i32) -> (i32, i32) {
    %c0_i32 = arith.constant 0 : i32
    %c0_i32_0 = arith.constant 0 : i32
    %c0_i32_1 = arith.constant 0 : i32
    return %c0_i32, %c0_i32_0 : i32, i32
  }
  func.func @transform_3(%arg0: i32) -> (i32, i32) {
    %c0_i32 = arith.constant 0 : i32
    %c0_i32_0 = arith.constant 0 : i32
    %c0_i32_1 = arith.constant 0 : i32
    return %c0_i32, %c0_i32_0 : i32, i32
  }
  func.func @transform_4(%arg0: i32) -> (i32, i32) {
    %c0_i32 = arith.constant 0 : i32
    %c0_i32_0 = arith.constant 0 : i32
    %c0_i32_1 = arith.constant 0 : i32
    return %c0_i32, %c0_i32_0 : i32, i32
  }
  func.func @transform_5(%arg0: i32) -> (i32, i32) {
    %c0_i32 = arith.constant 0 : i32
    %c0_i32_0 = arith.constant 0 : i32
    %c0_i32_1 = arith.constant 0 : i32
    return %c0_i32, %c0_i32_0 : i32, i32
  }
  func.func @transform_6(%arg0: i32) -> (i32, i32) {
    %c0_i32 = arith.constant 0 : i32
    %c0_i32_0 = arith.constant 0 : i32
    %c0_i32_1 = arith.constant 0 : i32
    return %c0_i32, %c0_i32_0 : i32, i32
  }
  func.func @transform_7(%arg0: i32) -> (i32, i32) {
    %c0_i32 = arith.constant 0 : i32
    %c0_i32_0 = arith.constant 0 : i32
    return %arg0, %c0_i32 : i32, i32
  }
}

</mosaic_0001>

<llo_original>
// kernel: tpu_custom_call.1
$region0: #{tpu_custom_call.1}
  #allocation0 [shape = 'u32[]', space=smem, size = 0x4, offset = 0x4, fixed_abs, tag = 'smem constant byte address 0x4 - core index']
  #allocation1 [shape = 'u32[144,128]{1,0:T(1,128)}', space=vmem, size = 0x12000, scoped, tag = 'internal scratch']
  %s0 = inlined_call_operand.vmem [shape: f32[16,32], index: 0, kind: input, shape index: {}]
  %s1 = inlined_call_operand.vmem [shape: f32[32,64], index: 1, kind: input, shape index: {}]
  %s2 = inlined_call_operand.vmem [shape: f32[1,64], index: 2, kind: input, shape index: {}]
  %s3 = inlined_call_operand.vmem [shape: f32[64,32], index: 3, kind: input, shape index: {}]
  %s4 = inlined_call_operand.vmem [shape: f32[1,32], index: 4, kind: input, shape index: {}]
  %s5 = inlined_call_operand.vmem [shape: f32[32,16], index: 5, kind: input, shape index: {}]
  %s6 = inlined_call_operand.vmem [shape: f32[1,16], index: 6, kind: input, shape index: {}]
  %s7 = inlined_call_operand.hbm [shape: f32[16,16], index: 7, kind: output, shape index: {}]
  %s8 = sld [smem:[#allocation0]]
  $region38: #{tpu_custom_call.1} parent=0
    _
  %s10 = ssub.s32 1, %s8
  %s11 = scalar_select 0, %s10, %s8
  $region1: #{tpu_custom_call.1} parent=0
    #allocation2 [shape = 'u8[8192]{0}', space=vmem, size = 0x2000, scoped, tag = 'output window, operand 0, single buffered']
    #allocation3 [shape = 's32[1]{0}', space=sflag, size = 0x4, scoped, tag = 'scoped memory for tpu_custom_call.1']
    %12 = vsyncpa [#allocation3], 0
    // Predicated region
    $region2: #{tpu_custom_call.1} parent=1 // pred_check
      _
    $region3: #{tpu_custom_call.1} parent=1 // pred_check_branch
      %14 = sbr.rel (0) target = $region5
    $region4: #{tpu_custom_call.1} parent=1 // pred_region
      _
    $region5: #{tpu_custom_call.1} parent=1 // pred_fallthru
      _
    // Predicated region
    $region6: #{tpu_custom_call.1} parent=1 // pred_check
      _
    $region7: #{tpu_custom_call.1} parent=1 // pred_check_branch
      %16 = sbr.rel (0) target = $region9
    $region8: #{tpu_custom_call.1} parent=1 // pred_region
      _
    $region9: #{tpu_custom_call.1} parent=1 // pred_fallthru
      _
    // Predicated region
    $region10: #{tpu_custom_call.1} parent=1 // pred_check
      _
    $region11: #{tpu_custom_call.1} parent=1 // pred_check_branch
      %18 = sbr.rel (0) target = $region13
    $region12: #{tpu_custom_call.1} parent=1 // pred_region
      _
    $region13: #{tpu_custom_call.1} parent=1 // pred_fallthru
      _
    // Predicated region
    $region14: #{tpu_custom_call.1} parent=1 // pred_check
      _
    $region15: #{tpu_custom_call.1} parent=1 // pred_check_branch
      %20 = sbr.rel (0) target = $region17
    $region16: #{tpu_custom_call.1} parent=1 // pred_region
      _
    $region17: #{tpu_custom_call.1} parent=1 // pred_fallthru
      _
    // Predicated region
    $region18: #{tpu_custom_call.1} parent=1 // pred_check
      _
    $region19: #{tpu_custom_call.1} parent=1 // pred_check_branch
      %22 = sbr.rel (0) target = $region21
    $region20: #{tpu_custom_call.1} parent=1 // pred_region
      _
    $region21: #{tpu_custom_call.1} parent=1 // pred_fallthru
      _
    // Predicated region
    $region22: #{tpu_custom_call.1} parent=1 // pred_check
      _
    $region23: #{tpu_custom_call.1} parent=1 // pred_check_branch
      %24 = sbr.rel (0) target = $region25
    $region24: #{tpu_custom_call.1} parent=1 // pred_region
      _
    $region25: #{tpu_custom_call.1} parent=1 // pred_fallthru
      _
    // Predicated region
    $region26: #{tpu_custom_call.1} parent=1 // pred_check
      _
    $region27: #{tpu_custom_call.1} parent=1 // pred_check_branch
      %26 = sbr.rel (0) target = $region29
    $region28: #{tpu_custom_call.1} parent=1 // pred_region
      _
    $region29: #{tpu_custom_call.1} parent=1 // pred_fallthru
      _
    %v27 = vld [vmem:[%s0] sm:$0xff]
    %v28 = vld [vmem:[%s0 + $0x8] sm:$0xff]
    %v29 = vld [vmem:[%s1] sm:$0xff]
    %v30 = vld [vmem:[%s1 + $0x8] sm:$0xff]
    %v31 = vld [vmem:[%s1 + $0x10] sm:$0xff]
    %v32 = vld [vmem:[%s1 + $0x18] sm:$0xff]
    %v33 = vld [vmem:[%s2] sm:$0x1]
    %v35 = vlaneseq
    %v36 = vshrl.u32 %v35, 7
    %v37 = vsub.s32 0, %v36
    %v38 = vrot.slane %v33, %v37
    %vm40 = vcmask 261120
    %v42 = vsel %vm40, %v27, 0
    %v45 = vsel %vm40, %v28, 0
    %47 = vmatprep.subr.mxu0 0.0
    %48 = vmatpush1.msra.mxu0 %v29
    %49 = vmatprep.subr.mxu0 0.0
    %50 = vmatpush1.msra.mxu0 %v30
    %51 = vmatprep.subr.mxu0 0.0
    %52 = vmatpush1.msra.mxu0 %v31
    %53 = vmatprep.subr.mxu0 0.0
    %54 = vmatpush1.msra.mxu0 %v32
    %55 = vmatprep.subr.mxu0 0.0
    %56 = vmatpush1.msra.mxu0 0.0
    %57 = vmatprep.subr.mxu0 0.0
    %58 = vmatpush1.msra.mxu0 0.0
    %59 = vmatprep.subr.mxu0 0.0
    %60 = vmatpush1.msra.mxu0 0.0
    %61 = vmatprep.subr.mxu0 0.0
    %62 = vmatpush1.msra.mxu0 0.0
    %63 = vmatprep.subr.mxu0 0.0
    %64 = vmatpush1.msra.mxu0 0.0
    %65 = vmatprep.subr.mxu0 0.0
    %66 = vmatpush1.msra.mxu0 0.0
    %67 = vmatprep.subr.mxu0 0.0
    %68 = vmatpush1.msra.mxu0 0.0
    %69 = vmatprep.subr.mxu0 0.0
    %70 = vmatpush1.msra.mxu0 0.0
    %71 = vmatprep.subr.mxu0 0.0
    %72 = vmatpush1.msra.mxu0 0.0
    %73 = vmatprep.subr.mxu0 0.0
    %74 = vmatpush1.msra.mxu0 0.0
    %75 = vmatprep.subr.mxu0 0.0
    %76 = vmatpush1.msra.mxu0 0.0
    %77 = vmatprep.subr.mxu0 0.0
    %78 = vmatpush1.msra.mxu0 0.0
    %79 = vmatprep.subr.mxu0 0.0
    %80 = vmatpush1.msra.mxu0 0.0
    %81 = vmatprep.subr.mxu0 0.0
    %82 = vmatpush1.msra.mxu0 0.0
    %83 = vmatprep.subr.mxu0 0.0
    %84 = vmatpush1.msra.mxu0 0.0
    %85 = vmatprep.subr.mxu0 0.0
    %86 = vmatpush1.msra.mxu0 0.0
    %87 = vmatprep.subr.mxu0 0.0
    %88 = vmatpush1.msra.mxu0 0.0
    %89 = vmatprep.subr.mxu0 0.0
    %90 = vmatpush1.msra.mxu0 0.0
    %91 = vmatprep.subr.mxu0 0.0
    %92 = vmatpush1.msra.mxu0 0.0
    %93 = vmatprep.subr.mxu0 0.0
    %94 = vmatpush1.msra.mxu0 0.0
    %95 = vmatprep.subr.mxu0 0.0
    %96 = vmatpush1.msra.mxu0 0.0
    %97 = vmatprep.subr.mxu0 0.0
    %98 = vmatpush1.msra.mxu0 0.0
    %99 = vmatprep.subr.mxu0 0.0
    %100 = vmatpush1.msra.mxu0 0.0
    %101 = vmatprep.subr.mxu0 0.0
    %102 = vmatpush1.msra.mxu0 0.0
    %103 = vmatprep.subr.mxu0 0.0
    %104 = vmatpush1.msra.mxu0 0.0
    %105 = vmatprep.subr.mxu0 0.0
    %106 = vmatpush1.msra.mxu0 0.0
    %107 = vmatprep.subr.mxu0 0.0
    %108 = vmatpush1.msra.mxu0 0.0
    %109 = vmatprep.subr.mxu0 0.0
    %110 = vmatpush1.msra.mxu0 0.0
    %111 = vmatprep.mubr.f32.mxu0 0.0
    %112 = vmatmul.mubr.f32.gmra.mrb[0].mxu0 %v42
    %v113 = vpop.f32.mrb[0].mxu0
    %v114 = vadd.f32 %v38, %v113
    %v115 = vpop.f32.mrb[0].mxu0
    %116 = vmatprep.mubr.f32.mxu0 0.0
    %117 = vmatmul.mubr.f32.gmra.mrb[0].mxu0 %v45
    %v118 = vpop.f32.mrb[0].mxu0
    %v119 = vadd.f32 %v38, %v118
    %v120 = vpop.f32.mrb[0].mxu0
    %121 = vdwg.mxu0
    %v122 = vmax.f32 %v114, 0.0
    %v123 = vmax.f32 %v119, 0.0
    %v124 = vld [vmem:[%s3] sm:$0xff]
    %v125 = vld [vmem:[%s3 + $0x8] sm:$0xff]
    %v126 = vld [vmem:[%s3 + $0x10] sm:$0xff]
    %v127 = vld [vmem:[%s3 + $0x18] sm:$0xff]
    %v128 = vld [vmem:[%s3 + $0x20] sm:$0xff]
    %v129 = vld [vmem:[%s3 + $0x28] sm:$0xff]
    %v130 = vld [vmem:[%s3 + $0x30] sm:$0xff]
    %v131 = vld [vmem:[%s3 + $0x38] sm:$0xff]
    %v132 = vld [vmem:[%s4] sm:$0x1]
    %v134 = vlaneseq
    %v135 = vshrl.u32 %v134, 7
    %v136 = vsub.s32 0, %v135
    %v137 = vrot.slane %v132, %v136
    %vm139 = vcmask 523264
    %v141 = vsel %vm139, %v122, 0
    %v144 = vsel %vm139, %v123, 0
    %146 = vmatprep.subr.mxu0 0.0
    %147 = vmatpush1.msra.mxu0 %v124
    %148 = vmatprep.subr.mxu0 0.0
    %149 = vmatpush1.msra.mxu0 %v125
    %150 = vmatprep.subr.mxu0 0.0
    %151 = vmatpush1.msra.mxu0 %v126
    %152 = vmatprep.subr.mxu0 0.0
    %153 = vmatpush1.msra.mxu0 %v127
    %154 = vmatprep.subr.mxu0 0.0
    %155 = vmatpush1.msra.mxu0 %v128
    %156 = vmatprep.subr.mxu0 0.0
    %157 = vmatpush1.msra.mxu0 %v129
    %158 = vmatprep.subr.mxu0 0.0
    %159 = vmatpush1.msra.mxu0 %v130
    %160 = vmatprep.subr.mxu0 0.0
    %161 = vmatpush1.msra.mxu0 %v131
    %162 = vmatprep.subr.mxu0 0.0
    %163 = vmatpush1.msra.mxu0 0.0
    %164 = vmatprep.subr.mxu0 0.0
    %165 = vmatpush1.msra.mxu0 0.0
    %166 = vmatprep.subr.mxu0 0.0
    %167 = vmatpush1.msra.mxu0 0.0
    %168 = vmatprep.subr.mxu0 0.0
    %169 = vmatpush1.msra.mxu0 0.0
    %170 = vmatprep.subr.mxu0 0.0
    %171 = vmatpush1.msra.mxu0 0.0
    %172 = vmatprep.subr.mxu0 0.0
    %173 = vmatpush1.msra.mxu0 0.0
    %174 = vmatprep.subr.mxu0 0.0
    %175 = vmatpush1.msra.mxu0 0.0
    %176 = vmatprep.subr.mxu0 0.0
    %177 = vmatpush1.msra.mxu0 0.0
    %178 = vmatprep.subr.mxu0 0.0
    %179 = vmatpush1.msra.mxu0 0.0
    %180 = vmatprep.subr.mxu0 0.0
    %181 = vmatpush1.msra.mxu0 0.0
    %182 = vmatprep.subr.mxu0 0.0
    %183 = vmatpush1.msra.mxu0 0.0
    %184 = vmatprep.subr.mxu0 0.0
    %185 = vmatpush1.msra.mxu0 0.0
    %186 = vmatprep.subr.mxu0 0.0
    %187 = vmatpush1.msra.mxu0 0.0
    %188 = vmatprep.subr.mxu0 0.0
    %189 = vmatpush1.msra.mxu0 0.0
    %190 = vmatprep.subr.mxu0 0.0
    %191 = vmatpush1.msra.mxu0 0.0
    %192 = vmatprep.subr.mxu0 0.0
    %193 = vmatpush1.msra.mxu0 0.0
    %194 = vmatprep.subr.mxu0 0.0
    %195 = vmatpush1.msra.mxu0 0.0
    %196 = vmatprep.subr.mxu0 0.0
    %197 = vmatpush1.msra.mxu0 0.0
    %198 = vmatprep.subr.mxu0 0.0
    %199 = vmatpush1.msra.mxu0 0.0
    %200 = vmatprep.subr.mxu0 0.0
    %201 = vmatpush1.msra.mxu0 0.0
    %202 = vmatprep.subr.mxu0 0.0
    %203 = vmatpush1.msra.mxu0 0.0
    %204 = vmatprep.subr.mxu0 0.0
    %205 = vmatpush1.msra.mxu0 0.0
    %206 = vmatprep.subr.mxu0 0.0
    %207 = vmatpush1.msra.mxu0 0.0
    %208 = vmatprep.subr.mxu0 0.0
    %209 = vmatpush1.msra.mxu0 0.0
    %210 = vmatprep.mubr.f32.mxu0 0.0
    %211 = vmatmul.mubr.f32.gmra.mrb[0].mxu0 %v141
    %v212 = vpop.f32.mrb[0].mxu0
    %v213 = vadd.f32 %v137, %v212
    %v214 = vpop.f32.mrb[0].mxu0
    %215 = vmatprep.mubr.f32.mxu0 0.0
    %216 = vmatmul.mubr.f32.gmra.mrb[0].mxu0 %v144
    %v217 = vpop.f32.mrb[0].mxu0
    %v218 = vadd.f32 %v137, %v217
    %v219 = vpop.f32.mrb[0].mxu0
    %220 = vdwg.mxu0
    %v221 = vmax.f32 %v213, 0.0
    %v222 = vmax.f32 %v218, 0.0
    %v223 = vld [vmem:[%s5] sm:$0xff]
    %v224 = vld [vmem:[%s5 + $0x8] sm:$0xff]
    %v225 = vld [vmem:[%s5 + $0x10] sm:$0xff]
    %v226 = vld [vmem:[%s5 + $0x18] sm:$0xff]
    %v227 = vld [vmem:[%s6] sm:$0x1]
    %v229 = vlaneseq
    %v230 = vshrl.u32 %v229, 7
    %v231 = vsub.s32 0, %v230
    %v232 = vrot.slane %v227, %v231
    %v235 = vsel %vm40, %v221, 0
    %v238 = vsel %vm40, %v222, 0
    %240 = vmatprep.subr.mxu0 0.0
    %241 = vmatpush1.msra.mxu0 %v223
    %242 = vmatprep.subr.mxu0 0.0
    %243 = vmatpush1.msra.mxu0 %v224
    %244 = vmatprep.subr.mxu0 0.0
    %245 = vmatpush1.msra.mxu0 %v225
    %246 = vmatprep.subr.mxu0 0.0
    %247 = vmatpush1.msra.mxu0 %v226
    %248 = vmatprep.subr.mxu0 0.0
    %249 = vmatpush1.msra.mxu0 0.0
    %250 = vmatprep.subr.mxu0 0.0
    %251 = vmatpush1.msra.mxu0 0.0
    %252 = vmatprep.subr.mxu0 0.0
    %253 = vmatpush1.msra.mxu0 0.0
    %254 = vmatprep.subr.mxu0 0.0
    %255 = vmatpush1.msra.mxu0 0.0
    %256 = vmatprep.subr.mxu0 0.0
    %257 = vmatpush1.msra.mxu0 0.0
    %258 = vmatprep.subr.mxu0 0.0
    %259 = vmatpush1.msra.mxu0 0.0
    %260 = vmatprep.subr.mxu0 0.0
    %261 = vmatpush1.msra.mxu0 0.0
    %262 = vmatprep.subr.mxu0 0.0
    %263 = vmatpush1.msra.mxu0 0.0
    %264 = vmatprep.subr.mxu0 0.0
    %265 = vmatpush1.msra.mxu0 0.0
    %266 = vmatprep.subr.mxu0 0.0
    %267 = vmatpush1.msra.mxu0 0.0
    %268 = vmatprep.subr.mxu0 0.0
    %269 = vmatpush1.msra.mxu0 0.0
    %270 = vmatprep.subr.mxu0 0.0
    %271 = vmatpush1.msra.mxu0 0.0
    %272 = vmatprep.subr.mxu0 0.0
    %273 = vmatpush1.msra.mxu0 0.0
    %274 = vmatprep.subr.mxu0 0.0
    %275 = vmatpush1.msra.mxu0 0.0
    %276 = vmatprep.subr.mxu0 0.0
    %277 = vmatpush1.msra.mxu0 0.0
    %278 = vmatprep.subr.mxu0 0.0
    %279 = vmatpush1.msra.mxu0 0.0
    %280 = vmatprep.subr.mxu0 0.0
    %281 = vmatpush1.msra.mxu0 0.0
    %282 = vmatprep.subr.mxu0 0.0
    %283 = vmatpush1.msra.mxu0 0.0
    %284 = vmatprep.subr.mxu0 0.0
    %285 = vmatpush1.msra.mxu0 0.0
    %286 = vmatprep.subr.mxu0 0.0
    %287 = vmatpush1.msra.mxu0 0.0
    %288 = vmatprep.subr.mxu0 0.0
    %289 = vmatpush1.msra.mxu0 0.0
    %290 = vmatprep.subr.mxu0 0.0
    %291 = vmatpush1.msra.mxu0 0.0
    %292 = vmatprep.subr.mxu0 0.0
    %293 = vmatpush1.msra.mxu0 0.0
    %294 = vmatprep.subr.mxu0 0.0
    %295 = vmatpush1.msra.mxu0 0.0
    %296 = vmatprep.subr.mxu0 0.0
    %297 = vmatpush1.msra.mxu0 0.0
    %298 = vmatprep.subr.mxu0 0.0
    %299 = vmatpush1.msra.mxu0 0.0
    %300 = vmatprep.subr.mxu0 0.0
    %301 = vmatpush1.msra.mxu0 0.0
    %302 = vmatprep.subr.mxu0 0.0
    %303 = vmatpush1.msra.mxu0 0.0
    %304 = vmatprep.mubr.f32.mxu0 0.0
    %305 = vmatmul.mubr.f32.gmra.mrb[0].mxu0 %v235
    %v306 = vpop.f32.mrb[0].mxu0
    %v307 = vadd.f32 %v232, %v306
    %v308 = vpop.f32.mrb[0].mxu0
    %309 = vmatprep.mubr.f32.mxu0 0.0
    %310 = vmatmul.mubr.f32.gmra.mrb[0].mxu0 %v238
    %v311 = vpop.f32.mrb[0].mxu0
    %v312 = vadd.f32 %v232, %v311
    %v313 = vpop.f32.mrb[0].mxu0
    %314 = vdwg.mxu0
    %vm315 = vcmask 130048
    %316 = vst.msk [vmem:[#allocation2] sm:$0xff] %vm315, %v307
    %317 = vst.msk [vmem:[#allocation2 + $0x8] sm:$0xff] %vm315, %v312
    // Predicated region
    $region30: #{tpu_custom_call.1} parent=1 // pred_check
      _
    $region31: #{tpu_custom_call.1} parent=1 // pred_check_branch
      %319 = sbr.rel (0) target = $region33
    $region32: #{tpu_custom_call.1} parent=1 // pred_region
      %s321 = ssub.s32 256, 256
      %322 = vsyncadd [#allocation3], %s321
      %s323 = sshll.u32 [#allocation2], 4
      %s324 = int_to_ptr.vmem [resolvable:$true] %s323
      %329 = dma.vmem_to_hbm [thread:$0]  %s324, 256, %s7, [#allocation3], 128, 128, 8
    $region33: #{tpu_custom_call.1} parent=1 // pred_fallthru
      _
    // Predicated region
    $region34: #{tpu_custom_call.1} parent=1 // pred_check
      _
    $region35: #{tpu_custom_call.1} parent=1 // pred_check_branch
      %331 = sbr.rel (0) target = $region37
    $region36: #{tpu_custom_call.1} parent=1 // pred_region
      %332 = dma.done [#allocation3], 256
    $region37: #{tpu_custom_call.1} parent=1 // pred_fallthru
      _
    %333 = vsyncpa [#allocation3], 1

</llo_original>
